<compile_context>
chip_gen: v7x
topology: tpu7x:2x2x1
jax: 0.10.0
libtpu: 0.0.40
codegen_flags: <defaults>
</compile_context>

<pallas_src>
import jax
import jax.numpy as jnp
from jax.experimental import pallas as pl
from jax.experimental.pallas import tpu as pltpu


def _leaky_relu(x, slope=0.2):
    return jnp.where(x > 0, x, slope * x)


def _discriminator_kernel(x_ref, w1_ref, b1_ref, w2_ref, b2_ref, w3_ref,
                          b3_ref, o_ref):
    # x block: (TB, A) f32, batch-major as stored in HBM.
    x = x_ref[...].astype(jnp.bfloat16)                     # (TB, A)

    # Layer 1: contract (64, A) with (TB, A) along A -> (64, TB).
    # Batch lands on the lane axis; everything downstream is lane-dense.
    h1 = jax.lax.dot_general(
        w1_ref[...], x,
        dimension_numbers=(((1,), (1,)), ((), ())),
        preferred_element_type=jnp.float32) + b1_ref[...]   # (64, TB) f32
    h1 = _leaky_relu(h1)

    # Layer 2: (16, 64) @ (64, TB) -> (16, TB).
    h2 = jnp.dot(w2_ref[...], h1.astype(jnp.bfloat16),
                 preferred_element_type=jnp.float32) + b2_ref[...]
    h2 = _leaky_relu(h2)                                    # (16, TB) f32

    # Layer 3: (1, 16) @ (16, TB) -> (1, TB); b3 is a scalar from SMEM.
    h3 = jnp.dot(w3_ref[...], h2.astype(jnp.bfloat16),
                 preferred_element_type=jnp.float32) + b3_ref[0]

    o_ref[...] = jax.nn.sigmoid(h3)                         # (1, TB) f32, unmasked vst


def _round_up(n, m):
    return pl.cdiv(n, m) * m


def discriminator_forward(x, params, block_b=4096, vmem_limit_bytes=None):
    """x: (B, action_dim) float32.  Returns (B, 1) float32 in [0, 1]."""
    B, A = x.shape
    w1, b1 = params["w1"], params["b1"]      # (64, A) bf16, (64, 1) f32
    w2, b2 = params["w2"], params["b2"]      # (16, 64) bf16, (16, 1) f32
    w3, b3 = params["w3"], params["b3"]      # (1, 16) bf16, (1,) f32

    # Batch tile: multiple of 128 (lane-dense output), capped at block_b and
    # at ~B/2 so v7x's two TensorCores both get a grid step.
    block_b = max(128, _round_up(block_b, 128))
    TB = min(block_b, max(128, _round_up(pl.cdiv(B, 2), 128)))
    nb = pl.cdiv(B, TB)                      # ragged last block, no jnp.pad

    cp = dict(dimension_semantics=("parallel",))
    if vmem_limit_bytes is not None:         # only needed for very large TB sweeps
        cp["vmem_limit_bytes"] = vmem_limit_bytes

    out = pl.pallas_call(
        _discriminator_kernel,
        out_shape=jax.ShapeDtypeStruct((1, B), jnp.float32),
        grid=(nb,),
        in_specs=[
            pl.BlockSpec((TB, A), lambda i: (i, 0)),            # x: tiled over batch
            pl.BlockSpec(w1.shape, lambda i: (0, 0)),            # resident weights
            pl.BlockSpec(b1.shape, lambda i: (0, 0)),
            pl.BlockSpec(w2.shape, lambda i: (0, 0)),
            pl.BlockSpec(b2.shape, lambda i: (0, 0)),
            pl.BlockSpec(w3.shape, lambda i: (0, 0)),
            pl.BlockSpec(memory_space=pltpu.MemorySpace.SMEM),   # b3 scalar in SMEM
        ],
        out_specs=pl.BlockSpec((1, TB), lambda i: (0, i)),       # lane-dense output
        compiler_params=pltpu.CompilerParams(**cp),
    )(x, w1, b1, w2, b2, w3, b3)

    return out[0].reshape(B, 1)


def init_params(action_dim, key):
    """Mirror PyTorch Linear default init (uniform +-1/sqrt(fan_in)).

    Weights stored (out, in) and pre-cast to bf16 (cast hoisted out of the
    kernel); biases kept f32, b1/b2 as (out, 1) columns, b3 as a scalar."""
    ks = jax.random.split(key, 6)

    def lin(kw, kb, fan_in, fan_out):
        bound = 1.0 / jnp.sqrt(fan_in)
        w = jax.random.uniform(kw, (fan_out, fan_in), jnp.float32, -bound, bound)
        b = jax.random.uniform(kb, (fan_out, 1), jnp.float32, -bound, bound)
        return w, b

    w1, b1 = lin(ks[0], ks[1], action_dim, 64)
    w2, b2 = lin(ks[2], ks[3], 64, 16)
    w3, b3 = lin(ks[4], ks[5], 16, 1)
    return {"w1": w1.astype(jnp.bfloat16), "b1": b1,
            "w2": w2.astype(jnp.bfloat16), "b2": b2,
            "w3": w3.astype(jnp.bfloat16), "b3": b3.reshape(1)}


def _reference_forward(x, p):
    """Pure-JAX f32 reference (same weight values, matches the PyTorch module)."""
    w1 = p["w1"].astype(jnp.float32)
    w2 = p["w2"].astype(jnp.float32)
    w3 = p["w3"].astype(jnp.float32)
    h = x @ w1.T + p["b1"][:, 0]
    h = jnp.where(h > 0, h, 0.2 * h)
    h = h @ w2.T + p["b2"][:, 0]
    h = jnp.where(h > 0, h, 0.2 * h)
    h = h @ w3.T + p["b3"]
    return jax.nn.sigmoid(h)


if __name__ == "__main__":
    key = jax.random.PRNGKey(0)
    k_x, k_p = jax.random.split(key)

    action_dim = 8
    batch = 300   # non-multiple of 128 -> ragged last block + 2 grid steps

    x = jax.random.normal(k_x, (batch, action_dim), dtype=jnp.float32)
    params = init_params(action_dim, k_p)

    out = discriminator_forward(x, params)
    out = jax.block_until_ready(out)

    ref = _reference_forward(x, params)
    assert out.shape == (batch, 1), out.shape
    # bf16 matmul operands => compare to the f32 reference with a loose tolerance.
    max_err = float(jnp.max(jnp.abs(out - ref)))
    assert max_err < 2e-2, max_err

    print("KERNEL_OK")
</pallas_src>

<mosaic_0001>
module attributes {stable_mosaic.version = 11 : i64} {
  func.func @_discriminator_kernel(%arg0: i32, %arg1: memref<256x8xf32, #tpu.memory_space<vmem>>, %arg2: memref<64x8xbf16, #tpu.memory_space<vmem>>, %arg3: memref<64x1xf32, #tpu.memory_space<vmem>>, %arg4: memref<16x64xbf16, #tpu.memory_space<vmem>>, %arg5: memref<16x1xf32, #tpu.memory_space<vmem>>, %arg6: memref<1x16xbf16, #tpu.memory_space<vmem>>, %arg7: memref<1xf32, #tpu.memory_space<smem>>, %arg8: memref<1x256xf32, #tpu.memory_space<vmem>>) attributes {dimension_semantics = [#tpu.dimension_semantics<parallel>], iteration_bounds = array<i64: 2>, scalar_prefetch = 0 : i64, scratch_operands = 0 : i64, tpu.core_type = #tpu.core_type<tc>, window_params = [{transform_indices = @transform_0, window_bounds = array<i64: 256, 8>}, {pipeline_mode = #tpu.pipeline_mode<synchronous>, transform_indices = @transform_1, window_bounds = array<i64: 64, 8>}, {pipeline_mode = #tpu.pipeline_mode<synchronous>, transform_indices = @transform_2, window_bounds = array<i64: 64, 1>}, {pipeline_mode = #tpu.pipeline_mode<synchronous>, transform_indices = @transform_3, window_bounds = array<i64: 16, 64>}, {pipeline_mode = #tpu.pipeline_mode<synchronous>, transform_indices = @transform_4, window_bounds = array<i64: 16, 1>}, {pipeline_mode = #tpu.pipeline_mode<synchronous>, transform_indices = @transform_5, window_bounds = array<i64: 1, 16>}, {transform_indices = @transform_6, window_bounds = array<i64: 1>}, {transform_indices = @transform_7, window_bounds = array<i64: 1, 256>}]} {
    %c0 = arith.constant 0 : index
    %c0_0 = arith.constant 0 : index
    %0 = vector.load %arg1[%c0, %c0_0] : memref<256x8xf32, #tpu.memory_space<vmem>>, vector<256x8xf32>
    %1 = arith.truncf %0 : vector<256x8xf32> to vector<256x8xbf16>
    %c0_1 = arith.constant 0 : index
    %c0_2 = arith.constant 0 : index
    %2 = vector.load %arg2[%c0_1, %c0_2] : memref<64x8xbf16, #tpu.memory_space<vmem>>, vector<64x8xbf16>
    %cst = arith.constant dense<0.000000e+00> : vector<64x256xf32>
    %3 = tpu.matmul %2, %1, %cst {dimension_numbers = #tpu.dot_dimension_numbers<[1], [1], [0], [0], [0, 0, 1, 0], [], []>} : vector<64x8xbf16>, vector<256x8xbf16>, vector<64x256xf32> -> vector<64x256xf32>
    %c0_3 = arith.constant 0 : index
    %c0_4 = arith.constant 0 : index
    %4 = vector.load %arg3[%c0_3, %c0_4] : memref<64x1xf32, #tpu.memory_space<vmem>>, vector<64x1xf32>
    %5 = vector.broadcast %4 : vector<64x1xf32> to vector<64x256xf32>
    %6 = arith.addf %3, %5 : vector<64x256xf32>
    %cst_5 = arith.constant 0.000000e+00 : f32
    %7 = vector.broadcast %cst_5 : f32 to vector<64x256xf32>
    %8 = arith.cmpf ogt, %6, %7 : vector<64x256xf32>
    %cst_6 = arith.constant 2.000000e-01 : f32
    %9 = vector.broadcast %cst_6 : f32 to vector<64x256xf32>
    %10 = arith.mulf %9, %6 : vector<64x256xf32>
    %11 = arith.select %8, %6, %10 : vector<64x256xi1>, vector<64x256xf32>
    %c0_7 = arith.constant 0 : index
    %c0_8 = arith.constant 0 : index
    %12 = vector.load %arg4[%c0_7, %c0_8] : memref<16x64xbf16, #tpu.memory_space<vmem>>, vector<16x64xbf16>
    %13 = arith.truncf %11 : vector<64x256xf32> to vector<64x256xbf16>
    %cst_9 = arith.constant dense<0.000000e+00> : vector<16x256xf32>
    %14 = tpu.matmul %12, %13, %cst_9 {dimension_numbers = #tpu.dot_dimension_numbers<[1], [0], [0], [1], [0, 0, 1, 1], [], []>} : vector<16x64xbf16>, vector<64x256xbf16>, vector<16x256xf32> -> vector<16x256xf32>
    %c0_10 = arith.constant 0 : index
    %c0_11 = arith.constant 0 : index
    %15 = vector.load %arg5[%c0_10, %c0_11] : memref<16x1xf32, #tpu.memory_space<vmem>>, vector<16x1xf32>
    %16 = vector.broadcast %15 : vector<16x1xf32> to vector<16x256xf32>
    %17 = arith.addf %14, %16 : vector<16x256xf32>
    %cst_12 = arith.constant 0.000000e+00 : f32
    %18 = vector.broadcast %cst_12 : f32 to vector<16x256xf32>
    %19 = arith.cmpf ogt, %17, %18 : vector<16x256xf32>
    %cst_13 = arith.constant 2.000000e-01 : f32
    %20 = vector.broadcast %cst_13 : f32 to vector<16x256xf32>
    %21 = arith.mulf %20, %17 : vector<16x256xf32>
    %22 = arith.select %19, %17, %21 : vector<16x256xi1>, vector<16x256xf32>
    %c0_14 = arith.constant 0 : index
    %c0_15 = arith.constant 0 : index
    %23 = vector.load %arg6[%c0_14, %c0_15] : memref<1x16xbf16, #tpu.memory_space<vmem>>, vector<1x16xbf16>
    %24 = arith.truncf %22 : vector<16x256xf32> to vector<16x256xbf16>
    %cst_16 = arith.constant dense<0.000000e+00> : vector<1x256xf32>
    %25 = tpu.matmul %23, %24, %cst_16 {dimension_numbers = #tpu.dot_dimension_numbers<[1], [0], [0], [1], [0, 0, 1, 1], [], []>} : vector<1x16xbf16>, vector<16x256xbf16>, vector<1x256xf32> -> vector<1x256xf32>
    %c0_17 = arith.constant 0 : index
    %26 = memref.load %arg7[%c0_17] : memref<1xf32, #tpu.memory_space<smem>>
    %27 = vector.broadcast %26 : f32 to vector<1x256xf32>
    %28 = arith.addf %25, %27 : vector<1x256xf32>
    %29 = arith.negf %28 : vector<1x256xf32>
    %30 = math.exp %29 : vector<1x256xf32>
    %cst_18 = arith.constant 1.000000e+00 : f32
    %31 = vector.broadcast %cst_18 : f32 to vector<1x256xf32>
    %32 = arith.addf %31, %30 : vector<1x256xf32>
    %33 = arith.divf %31, %32 : vector<1x256xf32>
    %c0_19 = arith.constant 0 : index
    %c0_20 = arith.constant 0 : index
    %34 = vector.load %arg8[%c0_19, %c0_20] : memref<1x256xf32, #tpu.memory_space<vmem>>, vector<1x256xf32>
    tpu.vector_store %arg8[%c0_19, %c0_20], %33 {strides = array<i32>} : memref<1x256xf32, #tpu.memory_space<vmem>>, vector<1x256xf32>,
    return
  }
  func.func @transform_0(%arg0: i32) -> (i32, i32) {
    %c0_i32 = arith.constant 0 : i32
    %c0_i32_0 = arith.constant 0 : i32
    return %arg0, %c0_i32 : i32, i32
  }
  func.func @transform_1(%arg0: i32) -> (i32, i32) {
    %c0_i32 = arith.constant 0 : i32
    %c0_i32_0 = arith.constant 0 : i32
    %c0_i32_1 = arith.constant 0 : i32
    return %c0_i32, %c0_i32_0 : i32, i32
  }
  func.func @transform_2(%arg0: i32) -> (i32, i32) {
    %c0_i32 = arith.constant 0 : i32
    %c0_i32_0 = arith.constant 0 : i32
    %c0_i32_1 = arith.constant 0 : i32
    return %c0_i32, %c0_i32_0 : i32, i32
  }
  func.func @transform_3(%arg0: i32) -> (i32, i32) {
    %c0_i32 = arith.constant 0 : i32
    %c0_i32_0 = arith.constant 0 : i32
    %c0_i32_1 = arith.constant 0 : i32
    return %c0_i32, %c0_i32_0 : i32, i32
  }
  func.func @transform_4(%arg0: i32) -> (i32, i32) {
    %c0_i32 = arith.constant 0 : i32
    %c0_i32_0 = arith.constant 0 : i32
    %c0_i32_1 = arith.constant 0 : i32
    return %c0_i32, %c0_i32_0 : i32, i32
  }
  func.func @transform_5(%arg0: i32) -> (i32, i32) {
    %c0_i32 = arith.constant 0 : i32
    %c0_i32_0 = arith.constant 0 : i32
    %c0_i32_1 = arith.constant 0 : i32
    return %c0_i32, %c0_i32_0 : i32, i32
  }
  func.func @transform_6(%arg0: i32) -> i32 {
    %c0_i32 = arith.constant 0 : i32
    %c0_i32_0 = arith.constant 0 : i32
    return %c0_i32 : i32
  }
  func.func @transform_7(%arg0: i32) -> (i32, i32) {
    %c0_i32 = arith.constant 0 : i32
    %c0_i32_0 = arith.constant 0 : i32
    return %c0_i32, %arg0 : i32, i32
  }
}

</mosaic_0001>

<llo_original>
// kernel: tpu_custom_call.1
$region0: #{tpu_custom_call.1}
  #allocation0 [shape = 'u32[]', space=smem, size = 0x4, offset = 0x4, fixed_abs, tag = 'smem constant byte address 0x4 - core index']
  #allocation1 [shape = 'u32[144,128]{1,0:T(1,128)}', space=vmem, size = 0x12000, scoped, tag = 'internal scratch']
  #allocation2 [shape = 'f32[1]{0:T(128)S(6)}', space=smem, size = 0x200, scoped, tag = 'scoped memory for tpu_custom_call.1']
  %s0 = inlined_call_operand.vmem [shape: f32[300,8], index: 0, kind: input, shape index: {}]
  %s1 = inlined_call_operand.vmem [shape: bf16[64,8], index: 1, kind: input, shape index: {}]
  %s2 = inlined_call_operand.vmem [shape: f32[64,1], index: 2, kind: input, shape index: {}]
  %s3 = inlined_call_operand.vmem [shape: bf16[16,64], index: 3, kind: input, shape index: {}]
  %s4 = inlined_call_operand.vmem [shape: f32[16,1], index: 4, kind: input, shape index: {}]
  %s5 = inlined_call_operand.vmem [shape: bf16[1,16], index: 5, kind: input, shape index: {}]
  %s6 = inlined_call_operand.<no memory space> [shape: f32[1], index: 6, kind: input, shape index: {}]
  %s7 = inlined_call_operand.hbm [shape: f32[1,300], index: 7, kind: output, shape index: {}]
  %s8 = sld [smem:[#allocation0]]
  $region61: #{tpu_custom_call.1} parent=0
    _
  %s10 = ssub.s32 1, %s8
  %s11 = scalar_select 0, %s10, %s8
  %12 = sst [smem:[#allocation2]] %s6
  $region1: #{tpu_custom_call.1} parent=0
    #allocation3 [shape = 'u8[2048]{0}', space=vmem, size = 0x800, scoped, tag = 'output window, operand 0']
    #allocation4 [shape = 's32[2]{0}', space=sflag, size = 0x8, scoped, tag = 'scoped memory for tpu_custom_call.1']
    %13 = vsyncpa [#allocation4], 0
    %s14 = scalar_lea.sflag [#allocation4], 1
    %15 = vsyncpa %s14, 0
    loop: start=0, step=1, limit=4
    $region2: #{tpu_custom_call.1} parent=1 // loop_pre_header
      _
    $region3: #{tpu_custom_call.1} parent=1 // loop_header
      %s17 = sphi 0, %s21
      %p18 = scmp.ge.s32.totalorder %s17, 4
      %s27 = sphi 0, %s29
      %s30 = sphi 0, %s27
      %s31 = sphi 0, %s30
      %s47 = sphi 0, %s31
      %s51 = sphi 0, %s51
      %s53 = sphi 0, %s51
      %s54 = sphi 0, %s53
      %s68 = sphi 0, %s54
      %s72 = sphi 0, %s72
      %s74 = sphi 0, %s72
      %s75 = sphi 0, %s74
      %s89 = sphi 0, %s75
      %s93 = sphi 0, %s93
      %s95 = sphi 0, %s93
      %s96 = sphi 0, %s95
      %s110 = sphi 0, %s96
      %s114 = sphi 0, %s114
      %s116 = sphi 0, %s114
      %s117 = sphi 0, %s116
      %s131 = sphi 0, %s117
      %s135 = sphi 0, %s135
      %s137 = sphi 0, %s135
      %s138 = sphi 0, %s137
      %s152 = sphi 0, %s138
      %s156 = sphi 0, %s156
      %s158 = sphi 0, %s156
      %s159 = sphi 0, %s158
      %s173 = sphi 0, %s159
      %s179 = sphi 0, %s181
      %s182 = sphi 0, %s179
      %s183 = sphi 0, %s182
      %s199 = sphi 0, %s183
    $region4: #{tpu_custom_call.1} parent=1 // loop_header_branch
      %20 = sbr.rel (%p18) target = $region8
    $region5: #{tpu_custom_call.1} parent=1 // loop_body
      %s22 = ssub.s32 %s17, 1
      %s23 = ssub.s32 %s17, 2
      %s24 = sadd.s32 %s17, 1
      %s25 = ssub.s32 %s17, %s24
      %p26 = scmp.eq.s32.totalorder %s25, 0
      %s28 = sadd.s32 %s27, 1
      %s29 = scalar_select %p26, %s27, %s28
      %p32 = pneg %p26
      %p33 = scmp.eq.s32.totalorder %s17, 1
      %p34 = por %p32, %p33
      %p35 = scmp.ne.s32.totalorder %s27, %s30
      %p36 = scmp.eq.s32.totalorder %s17, 0
      %p37 = por %p35, %p36
      %p38 = scmp.ne.s32.totalorder %s27, %s30
      %p39 = scmp.eq.s32.totalorder %s22, 1
      %p40 = por %p38, %p39
      %p41 = scmp.ne.s32.totalorder %s30, %s31
      %p42 = scmp.eq.s32.totalorder %s22, 0
      %p43 = por %p41, %p42
      %p44 = scmp.ne.s32.totalorder %s30, %s31
      %p45 = scmp.eq.s32.totalorder %s23, 1
      %p46 = por %p44, %p45
      %p48 = scmp.ne.s32.totalorder %s31, %s47
      %p49 = scmp.eq.s32.totalorder %s23, 0
      %p50 = por %p48, %p49
      %s52 = sadd.s32 %s51, 1
      %p55 = scmp.eq.s32.totalorder %s17, 1
      %p56 = scmp.ne.s32.totalorder %s51, %s53
      %p57 = scmp.eq.s32.totalorder %s17, 0
      %p58 = por %p56, %p57
      %p59 = scmp.ne.s32.totalorder %s51, %s53
      %p60 = scmp.eq.s32.totalorder %s22, 1
      %p61 = por %p59, %p60
      %p62 = scmp.ne.s32.totalorder %s53, %s54
      %p63 = scmp.eq.s32.totalorder %s22, 0
      %p64 = por %p62, %p63
      %p65 = scmp.ne.s32.totalorder %s53, %s54
      %p66 = scmp.eq.s32.totalorder %s23, 1
      %p67 = por %p65, %p66
      %p69 = scmp.ne.s32.totalorder %s54, %s68
      %p70 = scmp.eq.s32.totalorder %s23, 0
      %p71 = por %p69, %p70
      %s73 = sadd.s32 %s72, 1
      %p76 = scmp.eq.s32.totalorder %s17, 1
      %p77 = scmp.ne.s32.totalorder %s72, %s74
      %p78 = scmp.eq.s32.totalorder %s17, 0
      %p79 = por %p77, %p78
      %p80 = scmp.ne.s32.totalorder %s72, %s74
      %p81 = scmp.eq.s32.totalorder %s22, 1
      %p82 = por %p80, %p81
      %p83 = scmp.ne.s32.totalorder %s74, %s75
      %p84 = scmp.eq.s32.totalorder %s22, 0
      %p85 = por %p83, %p84
      %p86 = scmp.ne.s32.totalorder %s74, %s75
      %p87 = scmp.eq.s32.totalorder %s23, 1
      %p88 = por %p86, %p87
      %p90 = scmp.ne.s32.totalorder %s75, %s89
      %p91 = scmp.eq.s32.totalorder %s23, 0
      %p92 = por %p90, %p91
      %s94 = sadd.s32 %s93, 1
      %p97 = scmp.eq.s32.totalorder %s17, 1
      %p98 = scmp.ne.s32.totalorder %s93, %s95
      %p99 = scmp.eq.s32.totalorder %s17, 0
      %p100 = por %p98, %p99
      %p101 = scmp.ne.s32.totalorder %s93, %s95
      %p102 = scmp.eq.s32.totalorder %s22, 1
      %p103 = por %p101, %p102
      %p104 = scmp.ne.s32.totalorder %s95, %s96
      %p105 = scmp.eq.s32.totalorder %s22, 0
      %p106 = por %p104, %p105
      %p107 = scmp.ne.s32.totalorder %s95, %s96
      %p108 = scmp.eq.s32.totalorder %s23, 1
      %p109 = por %p107, %p108
      %p111 = scmp.ne.s32.totalorder %s96, %s110
      %p112 = scmp.eq.s32.totalorder %s23, 0
      %p113 = por %p111, %p112
      %s115 = sadd.s32 %s114, 1
      %p118 = scmp.eq.s32.totalorder %s17, 1
      %p119 = scmp.ne.s32.totalorder %s114, %s116
      %p120 = scmp.eq.s32.totalorder %s17, 0
      %p121 = por %p119, %p120
      %p122 = scmp.ne.s32.totalorder %s114, %s116
      %p123 = scmp.eq.s32.totalorder %s22, 1
      %p124 = por %p122, %p123
      %p125 = scmp.ne.s32.totalorder %s116, %s117
      %p126 = scmp.eq.s32.totalorder %s22, 0
      %p127 = por %p125, %p126
      %p128 = scmp.ne.s32.totalorder %s116, %s117
      %p129 = scmp.eq.s32.totalorder %s23, 1
      %p130 = por %p128, %p129
      %p132 = scmp.ne.s32.totalorder %s117, %s131
      %p133 = scmp.eq.s32.totalorder %s23, 0
      %p134 = por %p132, %p133
      %s136 = sadd.s32 %s135, 1
      %p139 = scmp.eq.s32.totalorder %s17, 1
      %p140 = scmp.ne.s32.totalorder %s135, %s137
      %p141 = scmp.eq.s32.totalorder %s17, 0
      %p142 = por %p140, %p141
      %p143 = scmp.ne.s32.totalorder %s135, %s137
      %p144 = scmp.eq.s32.totalorder %s22, 1
      %p145 = por %p143, %p144
      %p146 = scmp.ne.s32.totalorder %s137, %s138
      %p147 = scmp.eq.s32.totalorder %s22, 0
      %p148 = por %p146, %p147
      %p149 = scmp.ne.s32.totalorder %s137, %s138
      %p150 = scmp.eq.s32.totalorder %s23, 1
      %p151 = por %p149, %p150
      %p153 = scmp.ne.s32.totalorder %s138, %s152
      %p154 = scmp.eq.s32.totalorder %s23, 0
      %p155 = por %p153, %p154
      %s157 = sadd.s32 %s156, 1
      %p160 = scmp.eq.s32.totalorder %s17, 1
      %p161 = scmp.ne.s32.totalorder %s156, %s158
      %p162 = scmp.eq.s32.totalorder %s17, 0
      %p163 = por %p161, %p162
      %p164 = scmp.ne.s32.totalorder %s156, %s158
      %p165 = scmp.eq.s32.totalorder %s22, 1
      %p166 = por %p164, %p165
      %p167 = scmp.ne.s32.totalorder %s158, %s159
      %p168 = scmp.eq.s32.totalorder %s22, 0
      %p169 = por %p167, %p168
      %p170 = scmp.ne.s32.totalorder %s158, %s159
      %p171 = scmp.eq.s32.totalorder %s23, 1
      %p172 = por %p170, %p171
      %p174 = scmp.ne.s32.totalorder %s159, %s173
      %p175 = scmp.eq.s32.totalorder %s23, 0
      %p176 = por %p174, %p175
      %s177 = ssub.s32 %s17, %s24
      %p178 = scmp.eq.s32.totalorder %s177, 0
      %s180 = sadd.s32 %s179, 1
      %s181 = scalar_select %p178, %s179, %s180
      %p184 = pneg %p178
      %p185 = scmp.eq.s32.totalorder %s17, 1
      %p186 = por %p184, %p185
      %p187 = scmp.ne.s32.totalorder %s179, %s182
      %p188 = scmp.eq.s32.totalorder %s17, 0
      %p189 = por %p187, %p188
      %p190 = scmp.ne.s32.totalorder %s179, %s182
      %p191 = scmp.eq.s32.totalorder %s22, 1
      %p192 = por %p190, %p191
      %p193 = scmp.ne.s32.totalorder %s182, %s183
      %p194 = scmp.eq.s32.totalorder %s22, 0
      %p195 = por %p193, %p194
      %p196 = scmp.ne.s32.totalorder %s182, %s183
      %p197 = scmp.eq.s32.totalorder %s23, 1
      %p198 = por %p196, %p197
      %p200 = scmp.ne.s32.totalorder %s183, %s199
      %p201 = scmp.eq.s32.totalorder %s23, 0
      %p202 = por %p200, %p201
      %p203 = scmp.le.s32.totalorder 1, %s17
      %p204 = scmp.lt.s32.totalorder %s17, 3
      %p205 = pnand %p203, %p204
      %p206 = pneg %p205
      // Predicated region
      $region9: #{tpu_custom_call.1} parent=5 // pred_check
        _
      $region10: #{tpu_custom_call.1} parent=5 // pred_check_branch
        %208 = sbr.rel (%p205) target = $region12
      $region11: #{tpu_custom_call.1} parent=5 // pred_region
        %s209 = ssub.s32 %s17, 1
        // Predicated region
        $region13: #{tpu_custom_call.1} parent=11 // pred_check
          %p210 = pneg %p64
        $region14: #{tpu_custom_call.1} parent=11 // pred_check_branch
          %212 = sbr.rel (%p210) target = $region16
        $region15: #{tpu_custom_call.1} parent=11 // pred_region
          _
        $region16: #{tpu_custom_call.1} parent=11 // pred_fallthru
          _
        // Predicated region
        $region17: #{tpu_custom_call.1} parent=11 // pred_check
          %p213 = pneg %p85
        $region18: #{tpu_custom_call.1} parent=11 // pred_check_branch
          %215 = sbr.rel (%p213) target = $region20
        $region19: #{tpu_custom_call.1} parent=11 // pred_region
          _
        $region20: #{tpu_custom_call.1} parent=11 // pred_fallthru
          _
        // Predicated region
        $region21: #{tpu_custom_call.1} parent=11 // pred_check
          %p216 = pneg %p106
        $region22: #{tpu_custom_call.1} parent=11 // pred_check_branch
          %218 = sbr.rel (%p216) target = $region24
        $region23: #{tpu_custom_call.1} parent=11 // pred_region
          _
        $region24: #{tpu_custom_call.1} parent=11 // pred_fallthru
          _
        // Predicated region
        $region25: #{tpu_custom_call.1} parent=11 // pred_check
          %p219 = pneg %p127
        $region26: #{tpu_custom_call.1} parent=11 // pred_check_branch
          %221 = sbr.rel (%p219) target = $region28
        $region27: #{tpu_custom_call.1} parent=11 // pred_region
          _
        $region28: #{tpu_custom_call.1} parent=11 // pred_fallthru
          _
        // Predicated region
        $region29: #{tpu_custom_call.1} parent=11 // pred_check
          %p222 = pneg %p148
        $region30: #{tpu_custom_call.1} parent=11 // pred_check_branch
          %224 = sbr.rel (%p222) target = $region32
        $region31: #{tpu_custom_call.1} parent=11 // pred_region
          _
        $region32: #{tpu_custom_call.1} parent=11 // pred_fallthru
          _
        // Predicated region
        $region33: #{tpu_custom_call.1} parent=11 // pred_check
          %p225 = pneg %p169
        $region34: #{tpu_custom_call.1} parent=11 // pred_check_branch
          %227 = sbr.rel (%p225) target = $region36
        $region35: #{tpu_custom_call.1} parent=11 // pred_region
          _
        $region36: #{tpu_custom_call.1} parent=11 // pred_fallthru
          _
      $region12: #{tpu_custom_call.1} parent=5 // pred_fallthru
        _
      %p228 = scmp.lt.s32.totalorder %s17, 2
      // Predicated region
      $region37: #{tpu_custom_call.1} parent=5 // pred_check
        %p229 = pneg %p228
      $region38: #{tpu_custom_call.1} parent=5 // pred_check_branch
        %231 = sbr.rel (%p229) target = $region40
      $region39: #{tpu_custom_call.1} parent=5 // pred_region
        // Predicated region
        $region41: #{tpu_custom_call.1} parent=39 // pred_check
          %p232 = pneg %p37
        $region42: #{tpu_custom_call.1} parent=39 // pred_check_branch
          %234 = sbr.rel (%p232) target = $region44
        $region43: #{tpu_custom_call.1} parent=39 // pred_region
          %s235 = smul.u32 32, %s17
          %s236 = ssub.s32 38, %s235
          %p237 = scmp.lt.s32.totalorder %s236, 32
          %s238 = scalar_select %p237, %s236, 32
          %s239 = smul.u32 128, %s238
          %p240 = scmp.lt.s32.totalorder %s235, 37
          %s241 = scalar_select %p240, %s235, 37
          %s242 = smul.addr %s241, 8
          %s243 = scalar_lea.vmem %s0, %s242
          %s244 = smul.u32 32, %s17
          %s245 = ssub.s32 38, %s244
          %p246 = scmp.lt.s32.totalorder %s245, 32
          %s247 = scalar_select %p246, %s245, 32
          %s248 = smul.u32 128, %s247
        $region44: #{tpu_custom_call.1} parent=39 // pred_fallthru
          _
      $region40: #{tpu_custom_call.1} parent=5 // pred_fallthru
        _
      %p249 = scmp.le.s32.totalorder 1, %s17
      %p250 = scmp.lt.s32.totalorder %s17, 3
      %p251 = pnand %p249, %p250
      %p252 = pneg %p251
      // Predicated region
      $region45: #{tpu_custom_call.1} parent=5 // pred_check
        _
      $region46: #{tpu_custom_call.1} parent=5 // pred_check_branch
        %254 = sbr.rel (%p251) target = $region48
      $region47: #{tpu_custom_call.1} parent=5 // pred_region
        %s255 = ssub.s32 %s17, 1
        %s256 = smul.u32 32, %s22
        %s257 = ssub.s32 38, %s256
        %p258 = scmp.lt.s32.totalorder %s257, 32
        %s259 = scalar_select %p258, %s257, 32
        %s260 = smul.u32 128, %s259
        %p261 = scmp.lt.s32.totalorder %s256, 37
        %s262 = scalar_select %p261, %s256, 37
        %s263 = smul.addr %s262, 8
        %s264 = scalar_lea.vmem %s0, %s263
        %p265 = pneg %p43
        %p266 = pneg %p40
        %p267 = pneg %p64
        %p268 = pneg %p61
        %p269 = pneg %p85
        %p270 = pneg %p82
        %p271 = pneg %p106
        %p272 = pneg %p103
        %p273 = pneg %p127
        %p274 = pneg %p124
        %p275 = pneg %p148
        %p276 = pneg %p145
        %p277 = pneg %p169
        %p278 = pneg %p166
        %p279 = pneg %p195
        %p280 = pneg %p192
        %s281 = sand.u32 %s182, 1
        %s282 = scalar_lea.sflag [#allocation4], %s281
        %s283 = sand.u32 %s182, 1
        %s284 = smul.addr %s283, 2
        %s285 = scalar_lea.vmem [#allocation3], %s284
        %s286 = smul.u32 32, %s22
        %s287 = ssub.s32 38, %s286
        %p288 = scmp.lt.s32.totalorder %s287, 32
        %s289 = scalar_select %p288, %s287, 32
        %s290 = smul.u32 128, %s289
        %p291 = scmp.lt.s32.totalorder %s286, 37
        %s292 = scalar_select %p291, %s286, 37
        %s293 = smul.addr %s292, 8
        %s294 = scalar_lea.vmem %s0, %s293
        %s295 = smul.u32 32, %s22
        %s296 = ssub.s32 38, %s295
        %p297 = scmp.lt.s32.totalorder %s296, 32
        %s298 = scalar_select %p297, %s296, 32
        %s299 = smul.u32 128, %s298
        %s300 = smul.u32 2, %s22
        %s301 = ssub.s32 3, %s300
        %p302 = scmp.lt.s32.totalorder %s301, 2
        %s303 = scalar_select %p302, %s301, 2
        %s304 = smul.u32 16, %s303
        %v306 = vld [vmem:[%s294] sm:$0xff]
        %v307 = vld [vmem:[%s294 + $0x8] sm:$0xff]
        %v308 = vld [vmem:[%s294 + $0x10] sm:$0xff]
        %v309 = vld [vmem:[%s294 + $0x18] sm:$0xff]
        %v310 = vld [vmem:[%s294 + $0x20] sm:$0xff]
        %v311 = vld [vmem:[%s294 + $0x28] sm:$0xff]
        %v312 = vld [vmem:[%s294 + $0x30] sm:$0xff]
        %v313 = vld [vmem:[%s294 + $0x38] sm:$0xff]
        %v314 = vld [vmem:[%s294 + $0x40] sm:$0xff]
        %v315 = vld [vmem:[%s294 + $0x48] sm:$0xff]
        %v316 = vld [vmem:[%s294 + $0x50] sm:$0xff]
        %v317 = vld [vmem:[%s294 + $0x58] sm:$0xff]
        %v318 = vld [vmem:[%s294 + $0x60] sm:$0xff]
        %v319 = vld [vmem:[%s294 + $0x68] sm:$0xff]
        %v320 = vld [vmem:[%s294 + $0x70] sm:$0xff]
        %v321 = vld [vmem:[%s294 + $0x78] sm:$0xff]
        %v322 = vld [vmem:[%s294 + $0x80] sm:$0xff]
        %v323 = vld [vmem:[%s294 + $0x88] sm:$0xff]
        %v324 = vld [vmem:[%s294 + $0x90] sm:$0xff]
        %v325 = vld [vmem:[%s294 + $0x98] sm:$0xff]
        %v326 = vld [vmem:[%s294 + $0xa0] sm:$0xff]
        %v327 = vld [vmem:[%s294 + $0xa8] sm:$0xff]
        %v328 = vld [vmem:[%s294 + $0xb0] sm:$0xff]
        %v329 = vld [vmem:[%s294 + $0xb8] sm:$0xff]
        %v330 = vld [vmem:[%s294 + $0xc0] sm:$0xff]
        %v331 = vld [vmem:[%s294 + $0xc8] sm:$0xff]
        %v332 = vld [vmem:[%s294 + $0xd0] sm:$0xff]
        %v333 = vld [vmem:[%s294 + $0xd8] sm:$0xff]
        %v334 = vld [vmem:[%s294 + $0xe0] sm:$0xff]
        %v335 = vld [vmem:[%s294 + $0xe8] sm:$0xff]
        %v336 = vld [vmem:[%s294 + $0xf0] sm:$0xff]
        %v337 = vld [vmem:[%s294 + $0xf8] sm:$0xff]
        %v338 = vpack.c.bf16 %v307, %v306
        %v339 = vpack.c.bf16 %v309, %v308
        %v340 = vpack.c.bf16 %v311, %v310
        %v341 = vpack.c.bf16 %v313, %v312
        %v342 = vpack.c.bf16 %v315, %v314
        %v343 = vpack.c.bf16 %v317, %v316
        %v344 = vpack.c.bf16 %v319, %v318
        %v345 = vpack.c.bf16 %v321, %v320
        %v346 = vpack.c.bf16 %v323, %v322
        %v347 = vpack.c.bf16 %v325, %v324
        %v348 = vpack.c.bf16 %v327, %v326
        %v349 = vpack.c.bf16 %v329, %v328
        %v350 = vpack.c.bf16 %v331, %v330
        %v351 = vpack.c.bf16 %v333, %v332
        %v352 = vpack.c.bf16 %v335, %v334
        %v353 = vpack.c.bf16 %v337, %v336
        %v354 = vld [vmem:[%s1] sm:$0xf]
        %v355 = vld [vmem:[%s1 + $0x4] sm:$0xf]
        %v356 = vld [vmem:[%s1 + $0x8] sm:$0xf]
        %v357 = vld [vmem:[%s1 + $0xc] sm:$0xf]
        %v358 = vld [vmem:[%s1 + $0x10] sm:$0xf]
        %v359 = vld [vmem:[%s1 + $0x14] sm:$0xf]
        %v360 = vld [vmem:[%s1 + $0x18] sm:$0xf]
        %v361 = vld [vmem:[%s1 + $0x1c] sm:$0xf]
        %v362 = vld [vmem:[%s2] sm:$0xff]
        %v363 = vld [vmem:[%s2 + $0x8] sm:$0xff]
        %v364 = vld [vmem:[%s2 + $0x10] sm:$0xff]
        %v365 = vld [vmem:[%s2 + $0x18] sm:$0xff]
        %v366 = vld [vmem:[%s2 + $0x20] sm:$0xff]
        %v367 = vld [vmem:[%s2 + $0x28] sm:$0xff]
        %v368 = vld [vmem:[%s2 + $0x30] sm:$0xff]
        %v369 = vld [vmem:[%s2 + $0x38] sm:$0xff]
        %371 = vset.pattern.permute.xlu0 0
        %372 = vperm.xlu0 %371, %v362
        %v373 = vpop.permute.xlu0 %372
        %376 = vset.pattern.permute.xlu0 0
        %377 = vperm.xlu0 %376, %v363
        %v378 = vpop.permute.xlu0 %377
        %381 = vset.pattern.permute.xlu0 0
        %382 = vperm.xlu0 %381, %v364
        %v383 = vpop.permute.xlu0 %382
        %386 = vset.pattern.permute.xlu0 0
        %387 = vperm.xlu0 %386, %v365
        %v388 = vpop.permute.xlu0 %387
        %391 = vset.pattern.permute.xlu0 0
        %392 = vperm.xlu0 %391, %v366
        %v393 = vpop.permute.xlu0 %392
        %396 = vset.pattern.permute.xlu0 0
        %397 = vperm.xlu0 %396, %v367
        %v398 = vpop.permute.xlu0 %397
        %401 = vset.pattern.permute.xlu0 0
        %402 = vperm.xlu0 %401, %v368
        %v403 = vpop.permute.xlu0 %402
        %406 = vset.pattern.permute.xlu0 0
        %407 = vperm.xlu0 %406, %v369
        %v408 = vpop.permute.xlu0 %407
        %v418 = vunpack.c.l.b16 %v354
        %v419 = vunpack.c.l.b16 %v355
        %v420 = vunpack.c.l.b16 %v356
        %v421 = vunpack.c.l.b16 %v357
        %v422 = vunpack.c.l.b16 %v358
        %v423 = vunpack.c.l.b16 %v359
        %v424 = vunpack.c.l.b16 %v360
        %v425 = vunpack.c.l.b16 %v361
        %v426 = vpack.c.b16 %v419, %v418
        %v427 = vpack.c.b16 %v421, %v420
        %v428 = vpack.c.b16 %v423, %v422
        %v429 = vpack.c.b16 %v425, %v424
        %vm430 = vcmask 64512
        %v432 = vsel %vm430, %v426, 0
        %v435 = vsel %vm430, %v427, 0
        %v438 = vsel %vm430, %v428, 0
        %v441 = vsel %vm430, %v429, 0
        %v444 = vsel %vm430, %v338, 0
        %v447 = vsel %vm430, %v339, 0
        %v450 = vsel %vm430, %v340, 0
        %v453 = vsel %vm430, %v341, 0
        %v456 = vsel %vm430, %v342, 0
        %v459 = vsel %vm430, %v343, 0
        %v462 = vsel %vm430, %v344, 0
        %v465 = vsel %vm430, %v345, 0
        %v468 = vsel %vm430, %v346, 0
        %v471 = vsel %vm430, %v347, 0
        %v474 = vsel %vm430, %v348, 0
        %v477 = vsel %vm430, %v349, 0
        %v480 = vsel %vm430, %v350, 0
        %v483 = vsel %vm430, %v351, 0
        %v486 = vsel %vm430, %v352, 0
        %v489 = vsel %vm430, %v353, 0
        %491 = vmatprep.subr.bf16.mxu0 0
        %492 = vmatpush1.bf16.xpose.msra.mxu0 %v444
        %493 = vmatprep.subr.bf16.mxu0 0
        %494 = vmatpush1.bf16.xpose.msra.mxu0 %v447
        %495 = vmatprep.subr.bf16.mxu0 0
        %496 = vmatpush1.bf16.xpose.msra.mxu0 %v450
        %497 = vmatprep.subr.bf16.mxu0 0
        %498 = vmatpush1.bf16.xpose.msra.mxu0 %v453
        %499 = vmatprep.subr.bf16.mxu0 0
        %500 = vmatpush1.bf16.xpose.msra.mxu0 %v456
        %501 = vmatprep.subr.bf16.mxu0 0
        %502 = vmatpush1.bf16.xpose.msra.mxu0 %v459
        %503 = vmatprep.subr.bf16.mxu0 0
        %504 = vmatpush1.bf16.xpose.msra.mxu0 %v462
        %505 = vmatprep.subr.bf16.mxu0 0
        %506 = vmatpush1.bf16.xpose.msra.mxu0 %v465
        %507 = vmatprep.subr.bf16.mxu0 0
        %508 = vmatpush1.bf16.xpose.msra.mxu0 %v468
        %509 = vmatprep.subr.bf16.mxu0 0
        %510 = vmatpush1.bf16.xpose.msra.mxu0 %v471
        %511 = vmatprep.subr.bf16.mxu0 0
        %512 = vmatpush1.bf16.xpose.msra.mxu0 %v474
        %513 = vmatprep.subr.bf16.mxu0 0
        %514 = vmatpush1.bf16.xpose.msra.mxu0 %v477
        %515 = vmatprep.subr.bf16.mxu0 0
        %516 = vmatpush1.bf16.xpose.msra.mxu0 %v480
        %517 = vmatprep.subr.bf16.mxu0 0
        %518 = vmatpush1.bf16.xpose.msra.mxu0 %v483
        %519 = vmatprep.subr.bf16.mxu0 0
        %520 = vmatpush1.bf16.xpose.msra.mxu0 %v486
        %521 = vmatprep.subr.bf16.mxu0 0
        %522 = vmatpush1.bf16.xpose.msra.mxu0 %v489
        %523 = vmatprep.mubr.bf16.mxu0 0
        %524 = vmatmul.mubr.bf16.gmra.mrb[0].mxu0 %v432
        %v525 = vpop.f32.mrb[0].mxu0
        %v526 = vadd.f32 %v373, %v525
        %v527 = vpop.f32.mrb[0].mxu0
        %v528 = vadd.f32 %v373, %v527
        %v529 = vpop.f32.mrb[0].mxu0
        %v530 = vadd.f32 %v378, %v529
        %v531 = vpop.f32.mrb[0].mxu0
        %v532 = vadd.f32 %v378, %v531
        %533 = vmatprep.mubr.bf16.mxu0 0
        %534 = vmatmul.mubr.bf16.gmra.mrb[0].mxu0 %v435
        %v535 = vpop.f32.mrb[0].mxu0
        %v536 = vadd.f32 %v383, %v535
        %v537 = vpop.f32.mrb[0].mxu0
        %v538 = vadd.f32 %v383, %v537
        %v539 = vpop.f32.mrb[0].mxu0
        %v540 = vadd.f32 %v388, %v539
        %v541 = vpop.f32.mrb[0].mxu0
        %v542 = vadd.f32 %v388, %v541
        %543 = vmatprep.mubr.bf16.mxu0 0
        %544 = vmatmul.mubr.bf16.gmra.mrb[0].mxu0 %v438
        %v545 = vpop.f32.mrb[0].mxu0
        %v546 = vadd.f32 %v393, %v545
        %v547 = vpop.f32.mrb[0].mxu0
        %v548 = vadd.f32 %v393, %v547
        %v549 = vpop.f32.mrb[0].mxu0
        %v550 = vadd.f32 %v398, %v549
        %v551 = vpop.f32.mrb[0].mxu0
        %v552 = vadd.f32 %v398, %v551
        %553 = vmatprep.mubr.bf16.mxu0 0
        %554 = vmatmul.mubr.bf16.gmra.mrb[0].mxu0 %v441
        %v555 = vpop.f32.mrb[0].mxu0
        %v556 = vadd.f32 %v403, %v555
        %v557 = vpop.f32.mrb[0].mxu0
        %v558 = vadd.f32 %v403, %v557
        %v559 = vpop.f32.mrb[0].mxu0
        %v560 = vadd.f32 %v408, %v559
        %v561 = vpop.f32.mrb[0].mxu0
        %v562 = vadd.f32 %v408, %v561
        %563 = vdwg.mxu0
        %vm564 = vcmp.gt.f32.partialorder %v526, 0.0
        %vm565 = vcmp.gt.f32.partialorder %v528, 0.0
        %vm566 = vcmp.gt.f32.partialorder %v530, 0.0
        %vm567 = vcmp.gt.f32.partialorder %v532, 0.0
        %vm568 = vcmp.gt.f32.partialorder %v536, 0.0
        %vm569 = vcmp.gt.f32.partialorder %v538, 0.0
        %vm570 = vcmp.gt.f32.partialorder %v540, 0.0
        %vm571 = vcmp.gt.f32.partialorder %v542, 0.0
        %vm572 = vcmp.gt.f32.partialorder %v546, 0.0
        %vm573 = vcmp.gt.f32.partialorder %v548, 0.0
        %vm574 = vcmp.gt.f32.partialorder %v550, 0.0
        %vm575 = vcmp.gt.f32.partialorder %v552, 0.0
        %vm576 = vcmp.gt.f32.partialorder %v556, 0.0
        %vm577 = vcmp.gt.f32.partialorder %v558, 0.0
        %vm578 = vcmp.gt.f32.partialorder %v560, 0.0
        %vm579 = vcmp.gt.f32.partialorder %v562, 0.0
        %v580 = vmul.f32 %v526, 0.2
        %v581 = vmul.f32 %v528, 0.2
        %v582 = vmul.f32 %v530, 0.2
        %v583 = vmul.f32 %v532, 0.2
        %v584 = vmul.f32 %v536, 0.2
        %v585 = vmul.f32 %v538, 0.2
        %v586 = vmul.f32 %v540, 0.2
        %v587 = vmul.f32 %v542, 0.2
        %v588 = vmul.f32 %v546, 0.2
        %v589 = vmul.f32 %v548, 0.2
        %v590 = vmul.f32 %v550, 0.2
        %v591 = vmul.f32 %v552, 0.2
        %v592 = vmul.f32 %v556, 0.2
        %v593 = vmul.f32 %v558, 0.2
        %v594 = vmul.f32 %v560, 0.2
        %v595 = vmul.f32 %v562, 0.2
        %v596 = vsel %vm564, %v526, %v580
        %v597 = vsel %vm565, %v528, %v581
        %v598 = vsel %vm566, %v530, %v582
        %v599 = vsel %vm567, %v532, %v583
        %v600 = vsel %vm568, %v536, %v584
        %v601 = vsel %vm569, %v538, %v585
        %v602 = vsel %vm570, %v540, %v586
        %v603 = vsel %vm571, %v542, %v587
        %v604 = vsel %vm572, %v546, %v588
        %v605 = vsel %vm573, %v548, %v589
        %v606 = vsel %vm574, %v550, %v590
        %v607 = vsel %vm575, %v552, %v591
        %v608 = vsel %vm576, %v556, %v592
        %v609 = vsel %vm577, %v558, %v593
        %v610 = vsel %vm578, %v560, %v594
        %v611 = vsel %vm579, %v562, %v595
        %v612 = vld [vmem:[%s3] sm:$0xf]
        %v613 = vld [vmem:[%s3 + $0x4] sm:$0xf]
        %v614 = vpack.c.bf16 %v598, %v596
        %v615 = vpack.c.bf16 %v599, %v597
        %v616 = vpack.c.bf16 %v602, %v600
        %v617 = vpack.c.bf16 %v603, %v601
        %v618 = vpack.c.bf16 %v606, %v604
        %v619 = vpack.c.bf16 %v607, %v605
        %v620 = vpack.c.bf16 %v610, %v608
        %v621 = vpack.c.bf16 %v611, %v609
        %v622 = vld [vmem:[%s4] sm:$0xff]
        %v623 = vld [vmem:[%s4 + $0x8] sm:$0xff]
        %625 = vset.pattern.permute.xlu0 0
        %626 = vperm.xlu0 %625, %v622
        %v627 = vpop.permute.xlu0 %626
        %630 = vset.pattern.permute.xlu0 0
        %631 = vperm.xlu0 %630, %v623
        %v632 = vpop.permute.xlu0 %631
        %v636 = vunpack.c.l.b16 %v612
        %v637 = vunpack.c.l.b16 %v613
        %v638 = vpack.c.b16 %v637, %v636
        %vm639 = vcmask 523264
        %v641 = vsel %vm639, %v638, 0
        %643 = vmatprep.subr.bf16.mxu0 %v615
        %644 = vmatpush1.bf16.msra.mxu0 %v614
        %645 = vmatprep.subr.bf16.mxu0 %v617
        %646 = vmatpush1.bf16.msra.mxu0 %v616
        %647 = vmatprep.subr.bf16.mxu0 %v619
        %648 = vmatpush1.bf16.msra.mxu0 %v618
        %649 = vmatprep.subr.bf16.mxu0 %v621
        %650 = vmatpush1.bf16.msra.mxu0 %v620
        %651 = vmatprep.subr.bf16.mxu0 0
        %652 = vmatpush1.bf16.msra.mxu0 0
        %653 = vmatprep.subr.bf16.mxu0 0
        %654 = vmatpush1.bf16.msra.mxu0 0
        %655 = vmatprep.subr.bf16.mxu0 0
        %656 = vmatpush1.bf16.msra.mxu0 0
        %657 = vmatprep.subr.bf16.mxu0 0
        %658 = vmatpush1.bf16.msra.mxu0 0
        %659 = vmatprep.subr.bf16.mxu0 0
        %660 = vmatpush1.bf16.msra.mxu0 0
        %661 = vmatprep.subr.bf16.mxu0 0
        %662 = vmatpush1.bf16.msra.mxu0 0
        %663 = vmatprep.subr.bf16.mxu0 0
        %664 = vmatpush1.bf16.msra.mxu0 0
        %665 = vmatprep.subr.bf16.mxu0 0
        %666 = vmatpush1.bf16.msra.mxu0 0
        %667 = vmatprep.subr.bf16.mxu0 0
        %668 = vmatpush1.bf16.msra.mxu0 0
        %669 = vmatprep.subr.bf16.mxu0 0
        %670 = vmatpush1.bf16.msra.mxu0 0
        %671 = vmatprep.subr.bf16.mxu0 0
        %672 = vmatpush1.bf16.msra.mxu0 0
        %673 = vmatprep.subr.bf16.mxu0 0
        %674 = vmatpush1.bf16.msra.mxu0 0
        %675 = vmatprep.mubr.bf16.mxu0 0
        %676 = vmatmul.mubr.bf16.gmra.mrb[0].mxu0 %v641
        %v677 = vpop.f32.mrb[0].mxu0
        %v678 = vadd.f32 %v627, %v677
        %v679 = vpop.f32.mrb[0].mxu0
        %v680 = vadd.f32 %v627, %v679
        %v681 = vpop.f32.mrb[0].mxu0
        %v682 = vadd.f32 %v632, %v681
        %v683 = vpop.f32.mrb[0].mxu0
        %v684 = vadd.f32 %v632, %v683
        %685 = vdwg.mxu0
        %vm686 = vcmp.gt.f32.partialorder %v678, 0.0
        %vm687 = vcmp.gt.f32.partialorder %v680, 0.0
        %vm688 = vcmp.gt.f32.partialorder %v682, 0.0
        %vm689 = vcmp.gt.f32.partialorder %v684, 0.0
        %v690 = vmul.f32 %v678, 0.2
        %v691 = vmul.f32 %v680, 0.2
        %v692 = vmul.f32 %v682, 0.2
        %v693 = vmul.f32 %v684, 0.2
        %v694 = vsel %vm686, %v678, %v690
        %v695 = vsel %vm687, %v680, %v691
        %v696 = vsel %vm688, %v682, %v692
        %v697 = vsel %vm689, %v684, %v693
        %v698 = vld [vmem:[%s5] sm:$0x1]
        %v699 = vpack.c.bf16 %v696, %v694
        %v700 = vpack.c.bf16 %v697, %v695
        %s701 = sld [smem:[#allocation2]]
        %v702 = vstv %s701
        %vm703 = vcmask 130048
        %v705 = vsel %vm703, %v698, 0
        %707 = vmatprep.subr.bf16.mxu0 %v700
        %708 = vmatpush1.bf16.msra.mxu0 %v699
        %709 = vmatprep.subr.bf16.mxu0 0
        %710 = vmatpush1.bf16.msra.mxu0 0
        %711 = vmatprep.subr.bf16.mxu0 0
        %712 = vmatpush1.bf16.msra.mxu0 0
        %713 = vmatprep.subr.bf16.mxu0 0
        %714 = vmatpush1.bf16.msra.mxu0 0
        %715 = vmatprep.subr.bf16.mxu0 0
        %716 = vmatpush1.bf16.msra.mxu0 0
        %717 = vmatprep.subr.bf16.mxu0 0
        %718 = vmatpush1.bf16.msra.mxu0 0
        %719 = vmatprep.subr.bf16.mxu0 0
        %720 = vmatpush1.bf16.msra.mxu0 0
        %721 = vmatprep.subr.bf16.mxu0 0
        %722 = vmatpush1.bf16.msra.mxu0 0
        %723 = vmatprep.subr.bf16.mxu0 0
        %724 = vmatpush1.bf16.msra.mxu0 0
        %725 = vmatprep.subr.bf16.mxu0 0
        %726 = vmatpush1.bf16.msra.mxu0 0
        %727 = vmatprep.subr.bf16.mxu0 0
        %728 = vmatpush1.bf16.msra.mxu0 0
        %729 = vmatprep.subr.bf16.mxu0 0
        %730 = vmatpush1.bf16.msra.mxu0 0
        %731 = vmatprep.subr.bf16.mxu0 0
        %732 = vmatpush1.bf16.msra.mxu0 0
        %733 = vmatprep.subr.bf16.mxu0 0
        %734 = vmatpush1.bf16.msra.mxu0 0
        %735 = vmatprep.subr.bf16.mxu0 0
        %736 = vmatpush1.bf16.msra.mxu0 0
        %737 = vmatprep.subr.bf16.mxu0 0
        %738 = vmatpush1.bf16.msra.mxu0 0
        %739 = vmatprep.mubr.bf16.mxu0 0
        %740 = vmatmul.mubr.bf16.gmra.mrb[0].mxu0 %v705
        %v741 = vpop.f32.mrb[0].mxu0
        %v742 = vadd.f32 %v702, %v741
        %v743 = vpop.f32.mrb[0].mxu0
        %v744 = vadd.f32 %v702, %v743
        %v745 = vpop.f32.mrb[0].mxu0
        %v746 = vpop.f32.mrb[0].mxu0
        %747 = vdwg.mxu0
        %v748 = vxor.u32 %v742, 2147483648
        %v749 = vxor.u32 %v744, 2147483648
        %v750 = vmul.f32 %v748, 1.442695
        %v751 = vpow.pop %v750
        %v752 = vmul.f32 %v749, 1.442695
        %v753 = vpow.pop %v752
        %v754 = vadd.f32 %v751, 1.0
        %v755 = vadd.f32 %v753, 1.0
        %v756 = vrcp.pop %v754
        %v757 = vmul.f32 1.0, %v756
        %v758 = vrcp.pop %v755
        %v759 = vmul.f32 1.0, %v758
        %v762 = vcombine.low %v757, %v759
        %v764 = vunpack.c.l.s4 1966171168
        %v765 = vunpack.c.0.s8 %v764
        %v766 = vlaneseq
        %v767 = vshrl.u32 %v766, 7
        %v768 = vsub.s32 %v765, %v767
        %v769 = vrot.slane %v762, %v768
        %v771 = vunpack.c.l.s4 1966171168
        %v772 = vunpack.c.0.s8 %v771
        %v773 = vlaneseq
        %v774 = vshrl.u32 %v773, 7
        %v775 = vsub.s32 %v772, %v774
        %v776 = vrot.slane %v769, %v775
        %v778 = vlaneseq
        %vm779 = vcmp.ge.s32.totalorder %v778, 0
        %vm780 = vcmp.lt.s32.totalorder %v778, 256
        %vm781 = vmand %vm779, %vm780
        %782 = vst.msk [vmem:[%s285] sm:$0x3] %vm781, %v776
        %s783 = sand.u32 %s182, 1
        %s784 = scalar_lea.sflag [#allocation4], %s783
        %s785 = sand.u32 %s182, 1
        %s786 = smul.addr %s785, 2
        %s787 = scalar_lea.vmem [#allocation3], %s786
        // Predicated region
        $region49: #{tpu_custom_call.1} parent=47 // pred_check
          %p788 = pneg %p192
        $region50: #{tpu_custom_call.1} parent=47 // pred_check_branch
          %790 = sbr.rel (%p788) target = $region52
        $region51: #{tpu_custom_call.1} parent=47 // pred_region
          %s791 = smul.u32 2, %s22
          %s792 = ssub.s32 3, %s791
          %p793 = scmp.lt.s32.totalorder %s792, 2
          %s794 = scalar_select %p793, %s792, 2
          %s795 = smul.u32 16, %s794
          %s797 = ssub.s32 32, %s795
          %798 = vsyncadd %s784, %s797
          %p799 = scmp.ne.s32.totalorder 0, %s795
          %s800 = smul.addr %s791, 16
          %s801 = scalar_lea.hbm %s7, %s800
          %s802 = sshll.u32 %s794, 4
          %s803 = sshll.u32 %s787, 4
          %s804 = int_to_ptr.vmem [resolvable:$true] %s803
          %806 = dma.vmem_to_hbm [thread:$0]  (%p799), %s804, %s802, %s801, %s784
        $region52: #{tpu_custom_call.1} parent=47 // pred_fallthru
          _
      $region48: #{tpu_custom_call.1} parent=5 // pred_fallthru
        _
      %p807 = scmp.le.s32.totalorder 2, %s17
      // Predicated region
      $region53: #{tpu_custom_call.1} parent=5 // pred_check
        %p808 = pneg %p807
      $region54: #{tpu_custom_call.1} parent=5 // pred_check_branch
        %810 = sbr.rel (%p808) target = $region56
      $region55: #{tpu_custom_call.1} parent=5 // pred_region
        %s811 = ssub.s32 %s17, 2
        // Predicated region
        $region57: #{tpu_custom_call.1} parent=55 // pred_check
          %p812 = pneg %p198
        $region58: #{tpu_custom_call.1} parent=55 // pred_check_branch
          %814 = sbr.rel (%p812) target = $region60
        $region59: #{tpu_custom_call.1} parent=55 // pred_region
          %s815 = sand.u32 %s183, 1
          %s816 = scalar_lea.sflag [#allocation4], %s815
          %s817 = sand.u32 %s183, 1
          %s818 = smul.addr %s817, 2
          %s819 = scalar_lea.vmem [#allocation3], %s818
          %820 = dma.done %s816, 32
        $region60: #{tpu_custom_call.1} parent=55 // pred_fallthru
          _
      $region56: #{tpu_custom_call.1} parent=5 // pred_fallthru
        _
    $region6: #{tpu_custom_call.1} parent=1 // loop_footer
      %s21 = sadd.s32 1, %s17
    $region7: #{tpu_custom_call.1} parent=1 // loop_footer_branch
      %16 = sbr.rel target = $region3
    $region8: #{tpu_custom_call.1} parent=1 // loop_exit
      _
    %821 = vsyncpa [#allocation4], 1
    %s822 = scalar_lea.sflag [#allocation4], 1
    %823 = vsyncpa %s822, 1

</llo_original>
